<compile_context>
chip_gen: v5e
topology: v5e:2x2
jax: 0.10.0
libtpu: 0.0.40
codegen_flags: <defaults>
</compile_context>

<pallas_src>
import numpy as np
import jax
import jax.numpy as jnp
from jax import lax
from jax.experimental import pallas as pl
from jax.experimental.pallas import tpu as pltpu


def _vmem_budget():
    """(streamed-tile byte budget, scoped vmem_limit_bytes) per TPU generation."""
    # Default to the smallest machine (v7x-class: 64 MiB / TensorCore) so the
    # fallback is safe everywhere.
    vmem_bytes = 64 * 1024 * 1024
    try:
        info = pltpu.get_tpu_info()
        vmem_bytes = int(getattr(info, "vmem_capacity_bytes", vmem_bytes))
    except Exception:
        pass
    if vmem_bytes <= 64 * 1024 * 1024:
        return 4 * 1024 * 1024, 48 * 1024 * 1024       # v7x-class
    return 8 * 1024 * 1024, 96 * 1024 * 1024           # v5e / v6e (128 MiB VMEM)


def _pick_tile_rows(n_rows, cap, batch):
    """Largest divisor of n_rows <= cap, biased toward an even total grid."""
    # TODO(synk): handle n_rows with no good divisor (e.g. prime) via a
    # pl.cdiv grid + masked last tile instead of degrading to tiny tiles.
    cap = int(max(1, min(n_rows, cap)))
    divs = [d for d in range(1, cap + 1) if n_rows % d == 0]
    best = max(divs)
    # Prefer a step count that splits evenly across v7x's two TensorCores, as
    # long as the tile only shrinks by at most 2x.
    even = [d for d in divs if (batch * (n_rows // d)) % 2 == 0]
    if even and max(even) * 2 >= best:
        return max(even)
    return best


# --------------------------- with_conv=True ----------------------------------

def _conv_kernel(a_ref, b_ref, w_ref, bias_ref, o_ref, p_ref):
    """3x3 / stride-2 conv on a tile of output rows; zero pad folded in-kernel.

    a_ref   : (1, th, 2, Wo, 2C)  this tile's input rows as (row-pair, col-pair*C)
    b_ref   : (1, 1,  2, Wo, 2C)  first row-pair of the NEXT tile (kh=2 boundary)
    w_ref   : (9C, C)             packed weights (see wrapper for row order)
    bias_ref: (1, C) float32
    o_ref   : (1, th, Wo, C)
    p_ref   : (th, Wo, 5C)        scratch holding all shifted operands
    """
    th, Wo = a_ref.shape[1], a_ref.shape[3]
    C = a_ref.shape[4] // 2
    M = th * Wo
    cdt = a_ref.dtype

    # kh=2 input row for the tile's last output row: next tile's first row, or
    # the bottom zero-pad row on the last row tile.
    brow = jnp.where(pl.program_id(1) == pl.num_programs(1) - 1,
                     jnp.zeros_like(b_ref[0, 0, 0]),
                     b_ref[0, 0, 0])                           # (Wo, 2C)

    # Stage every shifted operand (row-shift kh=2, col-shift kw=2) into one
    # lane-dense scratch so it contracts in a single deep K=5C GEMM.
    #   lanes [0:2C)  : x[2j+2, 2l+{0,1}]  (kh=2, kw=0/1)
    #   lanes [2C:3C) : x[2j+0, 2l+2]      (kh=0, kw=2)
    #   lanes [3C:4C) : x[2j+1, 2l+2]      (kh=1, kw=2)
    #   lanes [4C:5C) : x[2j+2, 2l+2]      (kh=2, kw=2)
    if th > 1:
        p_ref[0:th - 1, :, 0:2 * C] = a_ref[0, 1:th, 0]
    p_ref[th - 1:th, :, 0:2 * C] = brow.reshape(1, Wo, 2 * C)
    p_ref[:, Wo - 1:Wo, 2 * C:5 * C] = jnp.zeros((th, 1, 3 * C), cdt)  # right pad col
    if Wo > 1:
        p_ref[:, 0:Wo - 1, 2 * C:3 * C] = a_ref[0, :, 0, 1:Wo, 0:C]
        p_ref[:, 0:Wo - 1, 3 * C:4 * C] = a_ref[0, :, 1, 1:Wo, 0:C]
        if th > 1:
            p_ref[0:th - 1, 0:Wo - 1, 4 * C:5 * C] = a_ref[0, 1:th, 0, 1:Wo, 0:C]
        p_ref[th - 1:th, 0:Wo - 1, 4 * C:5 * C] = brow[1:Wo, 0:C].reshape(1, Wo - 1, C)

    # 3 GEMMs, value-level f32 accumulation (no accumulator read-modify-write).
    acc = jnp.dot(a_ref[0, :, 0].reshape(M, 2 * C), w_ref[0:2 * C, :],
                  preferred_element_type=jnp.float32)
    acc = acc + jnp.dot(a_ref[0, :, 1].reshape(M, 2 * C), w_ref[2 * C:4 * C, :],
                        preferred_element_type=jnp.float32)
    acc = acc + jnp.dot(p_ref[...].reshape(M, 5 * C), w_ref[4 * C:9 * C, :],
                        preferred_element_type=jnp.float32)
    out = acc + bias_ref[...]
    o_ref[0] = out.reshape(th, Wo, C).astype(o_ref.dtype)


# --------------------------- with_conv=False ----------------------------------

def _pool_kernel(x_ref, o_ref):
    """2x2 / stride-2 average pool on a tile of output rows.

    x_ref: (1, th, 2, Wo, 2C);  o_ref: (1, th, Wo, C)
    """
    C = o_ref.shape[3]
    s = x_ref[0, :, 0] + x_ref[0, :, 1]                 # sum over the row pair
    o_ref[0] = ((s[..., 0:C] + s[..., C:2 * C]) * 0.25).astype(o_ref.dtype)


class Downsample:
    """JAX/Pallas port of the PyTorch Downsample module.

    __call__ takes/returns NCHW by default (PyTorch semantics); pass
    data_format="NHWC" for the transpose-free channels-last path.
    """

    def __init__(self, in_channels, with_conv, key=None, compute_dtype=jnp.bfloat16):
        self.with_conv = with_conv
        self.in_channels = in_channels
        self.compute_dtype = compute_dtype
        if with_conv:
            if key is None:
                key = jax.random.PRNGKey(42)
            kw_, kb_ = jax.random.split(key)
            # PyTorch Conv2d default init: U(-1/sqrt(fan_in), 1/sqrt(fan_in)).
            fan_in = in_channels * 3 * 3
            bound = 1.0 / np.sqrt(fan_in)
            self.weight = jax.random.uniform(       # (Cout, Cin, kh, kw)
                kw_, (in_channels, in_channels, 3, 3), jnp.float32, -bound, bound)
            self.bias = jax.random.uniform(
                kb_, (in_channels,), jnp.float32, -bound, bound)

            C = in_channels
            # w_r[kh, kw*C + ci, co] == weight[co, ci, kh, kw]
            w_r = jnp.transpose(self.weight, (2, 3, 1, 0)).reshape(3, 3 * C, C)
            # Row order matches the kernel's three GEMM operands.
            self._w_packed = jnp.concatenate(
                [w_r[0, 0:2 * C], w_r[1, 0:2 * C],                 # direct taps
                 w_r[2, 0:2 * C],                                  # packed: kh=2 kw=0/1
                 w_r[0, 2 * C:3 * C], w_r[1, 2 * C:3 * C],         # packed: kw=2, kh=0/1
                 w_r[2, 2 * C:3 * C]],                             # packed: kw=2, kh=2
                axis=0).astype(compute_dtype)                      # (9C, C)
            self._b_r = self.bias.reshape(1, C).astype(jnp.float32)

    def __call__(self, x, tile_rows=None, data_format="NCHW"):
        assert data_format in ("NCHW", "NHWC")
        if data_format == "NCHW":
            x = jnp.transpose(x, (0, 2, 3, 1))       # -> NHWC (channels on lanes)
        y = (self._conv_nhwc(x, tile_rows) if self.with_conv
             else self._pool_nhwc(x, tile_rows))
        if data_format == "NCHW":
            y = jnp.transpose(y, (0, 3, 1, 2))       # back to PyTorch layout
        return y

    # ---- with_conv=True: F.pad(x,(0,1,0,1)) + 3x3 stride-2 conv (pad in-kernel)
    def _conv_nhwc(self, x, tile_rows):
        N, H, W, C = x.shape
        assert C == self.in_channels
        # TODO(synk): odd H/W needs the last input row/col as a real boundary
        # fetch; only the even case (standard for diffusion) avoids jnp.pad.
        assert H % 2 == 0 and W % 2 == 0, "Pallas conv path requires even H and W"
        Ho, Wo = H // 2, W // 2
        cdt = self.compute_dtype
        csize = jnp.dtype(cdt).itemsize

        # Cast fuses into the producing transpose when called via the NCHW
        # wrapper; bf16 halves the kernel's HBM read traffic.
        # Free reshape: xq[n, j, s, l, q*C + c] == x[n, 2j+s, 2l+q, c].
        xq = x.astype(cdt).reshape(N, Ho, 2, Wo, 2 * C)

        tile_budget, vmem_limit = _vmem_budget()
        if tile_rows is None:
            row_bytes = 2 * Wo * 2 * C * csize
            tile_rows = _pick_tile_rows(Ho, tile_budget // max(1, row_bytes), N)
        th = int(tile_rows)
        assert Ho % th == 0, "tile_rows must divide the output height"
        nh = Ho // th

        out_bytes = N * Ho * Wo * C * jnp.dtype(x.dtype).itemsize
        cost = pl.CostEstimate(
            flops=2 * 9 * N * Ho * Wo * C * C,
            transcendentals=0,
            bytes_accessed=int(xq.size) * csize + int(out_bytes)
                           + int(self._w_packed.size) * csize)

        out = pl.pallas_call(
            _conv_kernel,
            grid=(N, nh),
            in_specs=[
                # main tile of xq rows
                pl.BlockSpec((1, th, 2, Wo, 2 * C), lambda n, i: (n, i, 0, 0, 0)),
                # boundary row-pair: next tile's first row (clamped in range on
                # the last tile, where the kernel masks it to the zero pad row)
                pl.BlockSpec((1, 1, 2, Wo, 2 * C),
                             lambda n, i, th=th, Ho=Ho:
                                 (n, jnp.minimum((i + 1) * th, Ho - 1), 0, 0, 0)),
                # weights / bias: resident across the whole grid
                pl.BlockSpec((9 * C, C), lambda n, i: (0, 0)),
                pl.BlockSpec((1, C), lambda n, i: (0, 0)),
            ],
            out_specs=pl.BlockSpec((1, th, Wo, C), lambda n, i: (n, i, 0, 0)),
            out_shape=jax.ShapeDtypeStruct((N, Ho, Wo, C), x.dtype),
            scratch_shapes=[pltpu.VMEM((th, Wo, 5 * C), cdt)],
            compiler_params=pltpu.CompilerParams(
                dimension_semantics=("parallel", "parallel"),
                vmem_limit_bytes=vmem_limit),
            cost_estimate=cost,
        )(xq, xq, self._w_packed, self._b_r)
        return out

    # ---- with_conv=False: avg_pool2d(kernel=2, stride=2) ----
    def _pool_nhwc(self, x, tile_rows):
        N, H, W, C = x.shape
        Ho, Wo = H // 2, W // 2
        if H != 2 * Ho or W != 2 * Wo:              # avg_pool2d floor behaviour
            x = x[:, :2 * Ho, :2 * Wo, :]
        xq = x.reshape(N, Ho, 2, Wo, 2 * C)         # free reshape

        tile_budget, vmem_limit = _vmem_budget()
        if tile_rows is None:
            row_bytes = 2 * Wo * 2 * C * jnp.dtype(x.dtype).itemsize
            tile_rows = _pick_tile_rows(Ho, tile_budget // max(1, row_bytes), N)
        th = int(tile_rows)
        assert Ho % th == 0, "tile_rows must divide the output height"
        nh = Ho // th

        return pl.pallas_call(
            _pool_kernel,
            grid=(N, nh),
            in_specs=[pl.BlockSpec((1, th, 2, Wo, 2 * C),
                                   lambda n, i: (n, i, 0, 0, 0))],
            out_specs=pl.BlockSpec((1, th, Wo, C), lambda n, i: (n, i, 0, 0)),
            out_shape=jax.ShapeDtypeStruct((N, Ho, Wo, C), x.dtype),
            compiler_params=pltpu.CompilerParams(
                dimension_semantics=("parallel", "parallel"),
                vmem_limit_bytes=vmem_limit),
        )(xq)


if __name__ == "__main__":
    x = jax.random.normal(jax.random.PRNGKey(0), (2, 4, 16, 16), dtype=jnp.float32)

    # ---- with_conv=True, f32 compute: tight check vs XLA conv ----
    down_f32 = Downsample(4, True, key=jax.random.PRNGKey(1),
                          compute_dtype=jnp.float32)
    y = jax.block_until_ready(down_f32(x))
    assert y.shape == (2, 4, 8, 8), y.shape
    x_pad = jnp.pad(x, ((0, 0), (0, 0), (0, 1), (0, 1)))
    y_ref = lax.conv_general_dilated(
        x_pad, down_f32.weight, window_strides=(2, 2), padding="VALID",
        dimension_numbers=("NCHW", "OIHW", "NCHW")) + down_f32.bias.reshape(1, -1, 1, 1)
    np.testing.assert_allclose(np.asarray(y), np.asarray(y_ref), atol=1e-5, rtol=1e-5)

    # multi-tile conv (exercises boundary-row fetch + last-tile pad masking)
    x2 = jax.random.normal(jax.random.PRNGKey(2), (1, 4, 16, 32), dtype=jnp.float32)
    y2 = jax.block_until_ready(down_f32(x2, tile_rows=2))
    assert y2.shape == (1, 4, 8, 16), y2.shape
    x2_pad = jnp.pad(x2, ((0, 0), (0, 0), (0, 1), (0, 1)))
    y2_ref = lax.conv_general_dilated(
        x2_pad, down_f32.weight, window_strides=(2, 2), padding="VALID",
        dimension_numbers=("NCHW", "OIHW", "NCHW")) + down_f32.bias.reshape(1, -1, 1, 1)
    np.testing.assert_allclose(np.asarray(y2), np.asarray(y2_ref), atol=1e-5, rtol=1e-5)

    # NHWC end-to-end path (no wrapper transposes)
    y_nhwc = jax.block_until_ready(
        down_f32(jnp.transpose(x, (0, 2, 3, 1)), data_format="NHWC"))
    np.testing.assert_allclose(np.asarray(y_nhwc),
                               np.asarray(jnp.transpose(y_ref, (0, 2, 3, 1))),
                               atol=1e-5, rtol=1e-5)

    # default bf16 compute path (f32 accumulation), looser tolerance
    down_bf16 = Downsample(4, True, key=jax.random.PRNGKey(1))
    yb = jax.block_until_ready(down_bf16(x))
    np.testing.assert_allclose(np.asarray(yb), np.asarray(y_ref), atol=5e-2, rtol=5e-2)

    # ---- with_conv=False: 2x2 / stride-2 average pool ----
    down_pool = Downsample(4, False)
    y_pool = jax.block_until_ready(down_pool(x))
    assert y_pool.shape == (2, 4, 8, 8), y_pool.shape
    y_pool_ref = x.reshape(2, 4, 8, 2, 8, 2).mean(axis=(3, 5))
    np.testing.assert_allclose(np.asarray(y_pool), np.asarray(y_pool_ref),
                               atol=1e-6, rtol=1e-6)

    y_pool2 = jax.block_until_ready(down_pool(x2, tile_rows=2))
    y_pool2_ref = x2.reshape(1, 4, 8, 2, 16, 2).mean(axis=(3, 5))
    np.testing.assert_allclose(np.asarray(y_pool2), np.asarray(y_pool2_ref),
                               atol=1e-6, rtol=1e-6)

    print("KERNEL_OK")
</pallas_src>

<mosaic_0001>
module attributes {stable_mosaic.version = 11 : i64} {
  func.func @_conv_kernel(%arg0: i32, %arg1: i32, %arg2: memref<1x8x2x8x8xf32, #tpu.memory_space<vmem>>, %arg3: memref<1x1x2x8x8xf32, #tpu.memory_space<vmem>>, %arg4: memref<36x4xf32, #tpu.memory_space<vmem>>, %arg5: memref<1x4xf32, #tpu.memory_space<vmem>>, %arg6: memref<1x8x8x4xf32, #tpu.memory_space<vmem>>, %arg7: memref<8x8x20xf32, #tpu.memory_space<vmem>>) attributes {dimension_semantics = [#tpu.dimension_semantics<parallel>, #tpu.dimension_semantics<parallel>], iteration_bounds = array<i64: 2, 1>, scalar_prefetch = 0 : i64, scratch_operands = 1 : i64, tpu.core_type = #tpu.core_type<tc>, window_params = [{transform_indices = @transform_0, window_bounds = array<i64: 1, 8, 2, 8, 8>}, {transform_indices = @transform_1, window_bounds = array<i64: 1, 1, 2, 8, 8>}, {pipeline_mode = #tpu.pipeline_mode<synchronous>, transform_indices = @transform_2, window_bounds = array<i64: 36, 4>}, {pipeline_mode = #tpu.pipeline_mode<synchronous>, transform_indices = @transform_3, window_bounds = array<i64: 1, 4>}, {transform_indices = @transform_4, window_bounds = array<i64: 1, 8, 8, 4>}]} {
    %c0_i32 = arith.constant 0 : i32
    %0 = arith.cmpi eq, %arg1, %c0_i32 : i32
    %cst = arith.constant 0.000000e+00 : f32
    %1 = vector.broadcast %cst : f32 to vector<8x8xf32>
    %c0 = arith.constant 0 : index
    %c0_0 = arith.constant 0 : index
    %c0_1 = arith.constant 0 : index
    %c0_2 = arith.constant 0 : index
    %c0_3 = arith.constant 0 : index
    %2 = vector.load %arg3[%c0, %c0_0, %c0_1, %c0_2, %c0_3] : memref<1x1x2x8x8xf32, #tpu.memory_space<vmem>>, vector<1x1x1x8x8xf32>
    %3 = vector.shape_cast %2 : vector<1x1x1x8x8xf32> to vector<8x8xf32>
    %4 = arith.select %0, %1, %3 : vector<8x8xf32>
    %c0_4 = arith.constant 0 : index
    %c1 = arith.constant 1 : index
    %c0_5 = arith.constant 0 : index
    %c0_6 = arith.constant 0 : index
    %c0_7 = arith.constant 0 : index
    %5 = vector.load %arg2[%c0_4, %c1, %c0_5, %c0_6, %c0_7] : memref<1x8x2x8x8xf32, #tpu.memory_space<vmem>>, vector<1x7x1x8x8xf32>
    %6 = vector.shape_cast %5 : vector<1x7x1x8x8xf32> to vector<7x8x8xf32>
    %c0_8 = arith.constant 0 : index
    %c0_9 = arith.constant 0 : index
    %c0_10 = arith.constant 0 : index
    %7 = vector.load %arg7[%c0_8, %c0_9, %c0_10] : memref<8x8x20xf32, #tpu.memory_space<vmem>>, vector<7x8x8xf32>
    tpu.vector_store %arg7[%c0_8, %c0_9, %c0_10], %6 {strides = array<i32>} : memref<8x8x20xf32, #tpu.memory_space<vmem>>, vector<7x8x8xf32>,
    %8 = vector.shape_cast %4 : vector<8x8xf32> to vector<1x8x8xf32>
    %c7 = arith.constant 7 : index
    %c0_11 = arith.constant 0 : index
    %c0_12 = arith.constant 0 : index
    %9 = vector.load %arg7[%c7, %c0_11, %c0_12] : memref<8x8x20xf32, #tpu.memory_space<vmem>>, vector<1x8x8xf32>
    tpu.vector_store %arg7[%c7, %c0_11, %c0_12], %8 {strides = array<i32>} : memref<8x8x20xf32, #tpu.memory_space<vmem>>, vector<1x8x8xf32>,
    %cst_13 = arith.constant 0.000000e+00 : f32
    %10 = vector.broadcast %cst_13 : f32 to vector<8x1x12xf32>
    %c0_14 = arith.constant 0 : index
    %c7_15 = arith.constant 7 : index
    %c8 = arith.constant 8 : index
    %11 = vector.load %arg7[%c0_14, %c7_15, %c8] : memref<8x8x20xf32, #tpu.memory_space<vmem>>, vector<8x1x12xf32>
    tpu.vector_store %arg7[%c0_14, %c7_15, %c8], %10 {strides = array<i32>} : memref<8x8x20xf32, #tpu.memory_space<vmem>>, vector<8x1x12xf32>,
    %c0_16 = arith.constant 0 : index
    %c0_17 = arith.constant 0 : index
    %c0_18 = arith.constant 0 : index
    %c1_19 = arith.constant 1 : index
    %c0_20 = arith.constant 0 : index
    %12 = vector.load %arg2[%c0_16, %c0_17, %c0_18, %c1_19, %c0_20] : memref<1x8x2x8x8xf32, #tpu.memory_space<vmem>>, vector<1x8x1x7x4xf32>
    %13 = vector.shape_cast %12 : vector<1x8x1x7x4xf32> to vector<8x7x4xf32>
    %c0_21 = arith.constant 0 : index
    %c0_22 = arith.constant 0 : index
    %c8_23 = arith.constant 8 : index
    %14 = vector.load %arg7[%c0_21, %c0_22, %c8_23] : memref<8x8x20xf32, #tpu.memory_space<vmem>>, vector<8x7x4xf32>
    tpu.vector_store %arg7[%c0_21, %c0_22, %c8_23], %13 {strides = array<i32>} : memref<8x8x20xf32, #tpu.memory_space<vmem>>, vector<8x7x4xf32>,
    %c0_24 = arith.constant 0 : index
    %c0_25 = arith.constant 0 : index
    %c1_26 = arith.constant 1 : index
    %c1_27 = arith.constant 1 : index
    %c0_28 = arith.constant 0 : index
    %15 = vector.load %arg2[%c0_24, %c0_25, %c1_26, %c1_27, %c0_28] : memref<1x8x2x8x8xf32, #tpu.memory_space<vmem>>, vector<1x8x1x7x4xf32>
    %16 = vector.shape_cast %15 : vector<1x8x1x7x4xf32> to vector<8x7x4xf32>
    %c0_29 = arith.constant 0 : index
    %c0_30 = arith.constant 0 : index
    %c12 = arith.constant 12 : index
    %17 = vector.load %arg7[%c0_29, %c0_30, %c12] : memref<8x8x20xf32, #tpu.memory_space<vmem>>, vector<8x7x4xf32>
    tpu.vector_store %arg7[%c0_29, %c0_30, %c12], %16 {strides = array<i32>} : memref<8x8x20xf32, #tpu.memory_space<vmem>>, vector<8x7x4xf32>,
    %c0_31 = arith.constant 0 : index
    %c1_32 = arith.constant 1 : index
    %c0_33 = arith.constant 0 : index
    %c1_34 = arith.constant 1 : index
    %c0_35 = arith.constant 0 : index
    %18 = vector.load %arg2[%c0_31, %c1_32, %c0_33, %c1_34, %c0_35] : memref<1x8x2x8x8xf32, #tpu.memory_space<vmem>>, vector<1x7x1x7x4xf32>
    %19 = vector.shape_cast %18 : vector<1x7x1x7x4xf32> to vector<7x7x4xf32>
    %c0_36 = arith.constant 0 : index
    %c0_37 = arith.constant 0 : index
    %c16 = arith.constant 16 : index
    %20 = vector.load %arg7[%c0_36, %c0_37, %c16] : memref<8x8x20xf32, #tpu.memory_space<vmem>>, vector<7x7x4xf32>
    tpu.vector_store %arg7[%c0_36, %c0_37, %c16], %19 {strides = array<i32>} : memref<8x8x20xf32, #tpu.memory_space<vmem>>, vector<7x7x4xf32>,
    %21 = vector.extract_strided_slice %4 {offsets = [1, 0], sizes = [7, 4], strides = [1, 1]} : vector<8x8xf32> to vector<7x4xf32>
    %22 = vector.shape_cast %21 : vector<7x4xf32> to vector<1x7x4xf32>
    %c7_38 = arith.constant 7 : index
    %c0_39 = arith.constant 0 : index
    %c16_40 = arith.constant 16 : index
    %23 = vector.load %arg7[%c7_38, %c0_39, %c16_40] : memref<8x8x20xf32, #tpu.memory_space<vmem>>, vector<1x7x4xf32>
    tpu.vector_store %arg7[%c7_38, %c0_39, %c16_40], %22 {strides = array<i32>} : memref<8x8x20xf32, #tpu.memory_space<vmem>>, vector<1x7x4xf32>,
    %c0_41 = arith.constant 0 : index
    %c0_42 = arith.constant 0 : index
    %c0_43 = arith.constant 0 : index
    %c0_44 = arith.constant 0 : index
    %c0_45 = arith.constant 0 : index
    %24 = vector.load %arg2[%c0_41, %c0_42, %c0_43, %c0_44, %c0_45] : memref<1x8x2x8x8xf32, #tpu.memory_space<vmem>>, vector<1x8x1x8x8xf32>
    %25 = vector.shape_cast %24 : vector<1x8x1x8x8xf32> to vector<8x8x8xf32>
    %26 = vector.shape_cast %25 : vector<8x8x8xf32> to vector<64x8xf32>
    %c0_46 = arith.constant 0 : index
    %c0_47 = arith.constant 0 : index
    %27 = vector.load %arg4[%c0_46, %c0_47] : memref<36x4xf32, #tpu.memory_space<vmem>>, vector<8x4xf32>
    %cst_48 = arith.constant dense<0.000000e+00> : vector<64x4xf32>
    %28 = tpu.matmul %26, %27, %cst_48 {dimension_numbers = #tpu.dot_dimension_numbers<[1], [0], [0], [1], [0, 0, 1, 1], [], []>} : vector<64x8xf32>, vector<8x4xf32>, vector<64x4xf32> -> vector<64x4xf32>
    %c0_49 = arith.constant 0 : index
    %c0_50 = arith.constant 0 : index
    %c1_51 = arith.constant 1 : index
    %c0_52 = arith.constant 0 : index
    %c0_53 = arith.constant 0 : index
    %29 = vector.load %arg2[%c0_49, %c0_50, %c1_51, %c0_52, %c0_53] : memref<1x8x2x8x8xf32, #tpu.memory_space<vmem>>, vector<1x8x1x8x8xf32>
    %30 = vector.shape_cast %29 : vector<1x8x1x8x8xf32> to vector<8x8x8xf32>
    %31 = vector.shape_cast %30 : vector<8x8x8xf32> to vector<64x8xf32>
    %c8_54 = arith.constant 8 : index
    %c0_55 = arith.constant 0 : index
    %32 = vector.load %arg4[%c8_54, %c0_55] : memref<36x4xf32, #tpu.memory_space<vmem>>, vector<8x4xf32>
    %cst_56 = arith.constant dense<0.000000e+00> : vector<64x4xf32>
    %33 = tpu.matmul %31, %32, %cst_56 {dimension_numbers = #tpu.dot_dimension_numbers<[1], [0], [0], [1], [0, 0, 1, 1], [], []>} : vector<64x8xf32>, vector<8x4xf32>, vector<64x4xf32> -> vector<64x4xf32>
    %34 = arith.addf %28, %33 : vector<64x4xf32>
    %c0_57 = arith.constant 0 : index
    %c0_58 = arith.constant 0 : index
    %c0_59 = arith.constant 0 : index
    %35 = vector.load %arg7[%c0_57, %c0_58, %c0_59] : memref<8x8x20xf32, #tpu.memory_space<vmem>>, vector<8x8x20xf32>
    %36 = vector.shape_cast %35 : vector<8x8x20xf32> to vector<64x20xf32>
    %c16_60 = arith.constant 16 : index
    %c0_61 = arith.constant 0 : index
    %37 = vector.load %arg4[%c16_60, %c0_61] : memref<36x4xf32, #tpu.memory_space<vmem>>, vector<20x4xf32>
    %cst_62 = arith.constant dense<0.000000e+00> : vector<64x4xf32>
    %38 = tpu.matmul %36, %37, %cst_62 {dimension_numbers = #tpu.dot_dimension_numbers<[1], [0], [0], [1], [0, 0, 1, 1], [], []>} : vector<64x20xf32>, vector<20x4xf32>, vector<64x4xf32> -> vector<64x4xf32>
    %39 = arith.addf %34, %38 : vector<64x4xf32>
    %c0_63 = arith.constant 0 : index
    %c0_64 = arith.constant 0 : index
    %40 = vector.load %arg5[%c0_63, %c0_64] : memref<1x4xf32, #tpu.memory_space<vmem>>, vector<1x4xf32>
    %41 = vector.broadcast %40 : vector<1x4xf32> to vector<64x4xf32>
    %42 = arith.addf %39, %41 : vector<64x4xf32>
    %43 = vector.shape_cast %42 : vector<64x4xf32> to vector<8x8x4xf32>
    %c0_65 = arith.constant 0 : index
    %c0_66 = arith.constant 0 : index
    %c0_67 = arith.constant 0 : index
    %c0_68 = arith.constant 0 : index
    %44 = vector.load %arg6[%c0_65, %c0_66, %c0_67, %c0_68] : memref<1x8x8x4xf32, #tpu.memory_space<vmem>>, vector<1x8x8x4xf32>
    %45 = vector.shape_cast %44 : vector<1x8x8x4xf32> to vector<8x8x4xf32>
    %46 = vector.shape_cast %43 : vector<8x8x4xf32> to vector<1x8x8x4xf32>
    tpu.vector_store %arg6[%c0_65, %c0_66, %c0_67, %c0_68], %46 {strides = array<i32>} : memref<1x8x8x4xf32, #tpu.memory_space<vmem>>, vector<1x8x8x4xf32>,
    return
  }
  func.func @transform_0(%arg0: i32, %arg1: i32) -> (i32, i32, i32, i32, i32) {
    %c0_i32 = arith.constant 0 : i32
    %c0_i32_0 = arith.constant 0 : i32
    %c0_i32_1 = arith.constant 0 : i32
    %c0_i32_2 = arith.constant 0 : i32
    return %arg0, %arg1, %c0_i32, %c0_i32_0, %c0_i32_1 : i32, i32, i32, i32, i32
  }
  func.func @transform_1(%arg0: i32, %arg1: i32) -> (i32, i32, i32, i32, i32) {
    %c1_i32 = arith.constant 1 : i32
    %0 = arith.addi %arg1, %c1_i32 : i32
    %c8_i32 = arith.constant 8 : i32
    %1 = arith.muli %0, %c8_i32 : i32
    %c7_i32 = arith.constant 7 : i32
    %2 = arith.minsi %1, %c7_i32 : i32
    %c0_i32 = arith.constant 0 : i32
    %c0_i32_0 = arith.constant 0 : i32
    %c0_i32_1 = arith.constant 0 : i32
    %c0_i32_2 = arith.constant 0 : i32
    return %arg0, %2, %c0_i32, %c0_i32_0, %c0_i32_1 : i32, i32, i32, i32, i32
  }
  func.func @transform_2(%arg0: i32, %arg1: i32) -> (i32, i32) {
    %c0_i32 = arith.constant 0 : i32
    %c0_i32_0 = arith.constant 0 : i32
    %c0_i32_1 = arith.constant 0 : i32
    return %c0_i32, %c0_i32_0 : i32, i32
  }
  func.func @transform_3(%arg0: i32, %arg1: i32) -> (i32, i32) {
    %c0_i32 = arith.constant 0 : i32
    %c0_i32_0 = arith.constant 0 : i32
    %c0_i32_1 = arith.constant 0 : i32
    return %c0_i32, %c0_i32_0 : i32, i32
  }
  func.func @transform_4(%arg0: i32, %arg1: i32) -> (i32, i32, i32, i32) {
    %c0_i32 = arith.constant 0 : i32
    %c0_i32_0 = arith.constant 0 : i32
    %c0_i32_1 = arith.constant 0 : i32
    return %arg0, %arg1, %c0_i32, %c0_i32_0 : i32, i32, i32, i32
  }
}

</mosaic_0001>

<llo_original>
// kernel: tpu_custom_call.1
$region0: #{tpu_custom_call.1}
  #allocation0 [shape = 'u32[]', space=smem, size = 0x4, offset = 0x4, fixed_abs, tag = 'smem constant byte address 0x4 - core index']
  #allocation1 [shape = 'u32[72,128]{1,0:T(1,128)}', space=vmem, size = 0x9000, scoped, tag = 'internal scratch']
  #allocation2 [shape = 'f32[8,8,20]{2,1,0:T(8,128)}', space=vmem, size = 0x8000, scoped, tag = 'scratch operand']
  %s0 = inlined_call_operand.hbm [shape: f32[2,8,2,8,8], index: 0, kind: input, shape index: {}]
  %s1 = inlined_call_operand.hbm [shape: f32[2,8,2,8,8], index: 1, kind: input, shape index: {}]
  %s2 = inlined_call_operand.vmem [shape: f32[36,4], index: 2, kind: input, shape index: {}]
  %s3 = inlined_call_operand.vmem [shape: f32[1,4], index: 3, kind: input, shape index: {}]
  %s4 = inlined_call_operand.vmem [shape: f32[2,8,8,4], index: 4, kind: output, shape index: {}]
  %s5 = sld [smem:[#allocation0]]
  $region57: #{tpu_custom_call.1} parent=0
    _
  %s7 = ssub.s32 1, %s5
  %s8 = scalar_select 0, %s7, %s5
  $region1: #{tpu_custom_call.1} parent=0
    #allocation3 [shape = 'u8[131072]{0}', space=vmem, size = 0x20000, scoped, tag = 'input window, operand 0']
    #allocation4 [shape = 's32[2]{0}', space=sflag, size = 0x8, scoped, tag = 'scoped memory for tpu_custom_call.1']
    #allocation5 [shape = 'u8[16384]{0}', space=vmem, size = 0x4000, scoped, tag = 'input window, operand 1']
    #allocation6 [shape = 's32[2]{0}', space=sflag, size = 0x8, scoped, tag = 'scoped memory for tpu_custom_call.1']
    %9 = vsyncpa [#allocation4], 0
    %s10 = scalar_lea.sflag [#allocation4], 1
    %11 = vsyncpa %s10, 0
    %12 = vsyncpa [#allocation6], 0
    %s13 = scalar_lea.sflag [#allocation6], 1
    %14 = vsyncpa %s13, 0
    loop: start=0, step=1, limit=4
    $region2: #{tpu_custom_call.1} parent=1 // loop_pre_header
      _
    $region3: #{tpu_custom_call.1} parent=1 // loop_header
      %s16 = sphi 0, %s20
      %p17 = scmp.ge.s32.totalorder %s16, 4
      %s23 = sphi 0, %s35
      %s24 = sphi 0, %s31
      %s25 = sphi 0, %s23
      %s26 = sphi 0, %s24
      %s27 = sphi 0, %s25
      %s28 = sphi 0, %s26
      %s40 = sphi 0, %s42
      %s43 = sphi 0, %s40
      %s44 = sphi 0, %s43
      %s60 = sphi 0, %s44
      %s76 = sphi 0, %s78
      %s79 = sphi 0, %s76
      %s80 = sphi 0, %s79
      %s96 = sphi 0, %s80
      %s100 = sphi 0, %s100
      %s102 = sphi 0, %s100
      %s103 = sphi 0, %s102
      %s117 = sphi 0, %s103
      %s121 = sphi 0, %s121
      %s123 = sphi 0, %s121
      %s124 = sphi 0, %s123
      %s138 = sphi 0, %s124
      %s146 = sphi 0, %s148
      %s149 = sphi 0, %s146
      %s150 = sphi 0, %s149
      %s166 = sphi 0, %s150
    $region4: #{tpu_custom_call.1} parent=1 // loop_header_branch
      %19 = sbr.rel (%p17) target = $region8
    $region5: #{tpu_custom_call.1} parent=1 // loop_body
      %s21 = ssub.s32 %s16, 1
      %s22 = ssub.s32 %s16, 2
      %s29 = sadd.s32 1, %s24
      %p30 = scmp.ge.s32.totalorder %s29, 1
      %s31 = scalar_select %p30, 0, %s29
      %s32 = sadd.s32 1, %s23
      %s33 = scalar_select %p30, %s32, %s23
      %p34 = scmp.ge.s32.totalorder %s33, 2
      %s35 = scalar_select %p34, 0, %s33
      %s36 = ssub.s32 %s23, %s35
      %s37 = ssub.s32 %s24, %s31
      %s38 = sor.u32 %s36, %s37
      %p39 = scmp.eq.s32.totalorder %s38, 0
      %s41 = sadd.s32 %s40, 1
      %s42 = scalar_select %p39, %s40, %s41
      %p45 = pneg %p39
      %p46 = scmp.eq.s32.totalorder %s16, 1
      %p47 = por %p45, %p46
      %p48 = scmp.ne.s32.totalorder %s40, %s43
      %p49 = scmp.eq.s32.totalorder %s16, 0
      %p50 = por %p48, %p49
      %p51 = scmp.ne.s32.totalorder %s40, %s43
      %p52 = scmp.eq.s32.totalorder %s21, 1
      %p53 = por %p51, %p52
      %p54 = scmp.ne.s32.totalorder %s43, %s44
      %p55 = scmp.eq.s32.totalorder %s21, 0
      %p56 = por %p54, %p55
      %p57 = scmp.ne.s32.totalorder %s43, %s44
      %p58 = scmp.eq.s32.totalorder %s22, 1
      %p59 = por %p57, %p58
      %p61 = scmp.ne.s32.totalorder %s44, %s60
      %p62 = scmp.eq.s32.totalorder %s22, 0
      %p63 = por %p61, %p62
      %s64 = sadd.s32 %s24, 1
      %s65 = smul.u32 %s64, 8
      %p66 = scmp.lt.s32.totalorder %s65, 7
      %s67 = scalar_select %p66, %s65, 7
      %s68 = sadd.s32 %s31, 1
      %s69 = smul.u32 %s68, 8
      %p70 = scmp.lt.s32.totalorder %s69, 7
      %s71 = scalar_select %p70, %s69, 7
      %s72 = ssub.s32 %s23, %s35
      %s73 = ssub.s32 %s67, %s71
      %s74 = sor.u32 %s72, %s73
      %p75 = scmp.eq.s32.totalorder %s74, 0
      %s77 = sadd.s32 %s76, 1
      %s78 = scalar_select %p75, %s76, %s77
      %p81 = pneg %p75
      %p82 = scmp.eq.s32.totalorder %s16, 1
      %p83 = por %p81, %p82
      %p84 = scmp.ne.s32.totalorder %s76, %s79
      %p85 = scmp.eq.s32.totalorder %s16, 0
      %p86 = por %p84, %p85
      %p87 = scmp.ne.s32.totalorder %s76, %s79
      %p88 = scmp.eq.s32.totalorder %s21, 1
      %p89 = por %p87, %p88
      %p90 = scmp.ne.s32.totalorder %s79, %s80
      %p91 = scmp.eq.s32.totalorder %s21, 0
      %p92 = por %p90, %p91
      %p93 = scmp.ne.s32.totalorder %s79, %s80
      %p94 = scmp.eq.s32.totalorder %s22, 1
      %p95 = por %p93, %p94
      %p97 = scmp.ne.s32.totalorder %s80, %s96
      %p98 = scmp.eq.s32.totalorder %s22, 0
      %p99 = por %p97, %p98
      %s101 = sadd.s32 %s100, 1
      %p104 = scmp.eq.s32.totalorder %s16, 1
      %p105 = scmp.ne.s32.totalorder %s100, %s102
      %p106 = scmp.eq.s32.totalorder %s16, 0
      %p107 = por %p105, %p106
      %p108 = scmp.ne.s32.totalorder %s100, %s102
      %p109 = scmp.eq.s32.totalorder %s21, 1
      %p110 = por %p108, %p109
      %p111 = scmp.ne.s32.totalorder %s102, %s103
      %p112 = scmp.eq.s32.totalorder %s21, 0
      %p113 = por %p111, %p112
      %p114 = scmp.ne.s32.totalorder %s102, %s103
      %p115 = scmp.eq.s32.totalorder %s22, 1
      %p116 = por %p114, %p115
      %p118 = scmp.ne.s32.totalorder %s103, %s117
      %p119 = scmp.eq.s32.totalorder %s22, 0
      %p120 = por %p118, %p119
      %s122 = sadd.s32 %s121, 1
      %p125 = scmp.eq.s32.totalorder %s16, 1
      %p126 = scmp.ne.s32.totalorder %s121, %s123
      %p127 = scmp.eq.s32.totalorder %s16, 0
      %p128 = por %p126, %p127
      %p129 = scmp.ne.s32.totalorder %s121, %s123
      %p130 = scmp.eq.s32.totalorder %s21, 1
      %p131 = por %p129, %p130
      %p132 = scmp.ne.s32.totalorder %s123, %s124
      %p133 = scmp.eq.s32.totalorder %s21, 0
      %p134 = por %p132, %p133
      %p135 = scmp.ne.s32.totalorder %s123, %s124
      %p136 = scmp.eq.s32.totalorder %s22, 1
      %p137 = por %p135, %p136
      %p139 = scmp.ne.s32.totalorder %s124, %s138
      %p140 = scmp.eq.s32.totalorder %s22, 0
      %p141 = por %p139, %p140
      %s142 = ssub.s32 %s23, %s35
      %s143 = ssub.s32 %s24, %s31
      %s144 = sor.u32 %s142, %s143
      %p145 = scmp.eq.s32.totalorder %s144, 0
      %s147 = sadd.s32 %s146, 1
      %s148 = scalar_select %p145, %s146, %s147
      %p151 = pneg %p145
      %p152 = scmp.eq.s32.totalorder %s16, 1
      %p153 = por %p151, %p152
      %p154 = scmp.ne.s32.totalorder %s146, %s149
      %p155 = scmp.eq.s32.totalorder %s16, 0
      %p156 = por %p154, %p155
      %p157 = scmp.ne.s32.totalorder %s146, %s149
      %p158 = scmp.eq.s32.totalorder %s21, 1
      %p159 = por %p157, %p158
      %p160 = scmp.ne.s32.totalorder %s149, %s150
      %p161 = scmp.eq.s32.totalorder %s21, 0
      %p162 = por %p160, %p161
      %p163 = scmp.ne.s32.totalorder %s149, %s150
      %p164 = scmp.eq.s32.totalorder %s22, 1
      %p165 = por %p163, %p164
      %p167 = scmp.ne.s32.totalorder %s150, %s166
      %p168 = scmp.eq.s32.totalorder %s22, 0
      %p169 = por %p167, %p168
      %p170 = scmp.le.s32.totalorder 1, %s16
      %p171 = scmp.lt.s32.totalorder %s16, 3
      %p172 = pnand %p170, %p171
      %p173 = pneg %p172
      // Predicated region
      $region9: #{tpu_custom_call.1} parent=5 // pred_check
        _
      $region10: #{tpu_custom_call.1} parent=5 // pred_check_branch
        %175 = sbr.rel (%p172) target = $region12
      $region11: #{tpu_custom_call.1} parent=5 // pred_region
        %s176 = ssub.s32 %s16, 1
        // Predicated region
        $region13: #{tpu_custom_call.1} parent=11 // pred_check
          %p177 = pneg %p113
        $region14: #{tpu_custom_call.1} parent=11 // pred_check_branch
          %179 = sbr.rel (%p177) target = $region16
        $region15: #{tpu_custom_call.1} parent=11 // pred_region
          _
        $region16: #{tpu_custom_call.1} parent=11 // pred_fallthru
          _
        // Predicated region
        $region17: #{tpu_custom_call.1} parent=11 // pred_check
          %p180 = pneg %p134
        $region18: #{tpu_custom_call.1} parent=11 // pred_check_branch
          %182 = sbr.rel (%p180) target = $region20
        $region19: #{tpu_custom_call.1} parent=11 // pred_region
          _
        $region20: #{tpu_custom_call.1} parent=11 // pred_fallthru
          _
      $region12: #{tpu_custom_call.1} parent=5 // pred_fallthru
        _
      %p183 = scmp.lt.s32.totalorder %s16, 2
      // Predicated region
      $region21: #{tpu_custom_call.1} parent=5 // pred_check
        %p184 = pneg %p183
      $region22: #{tpu_custom_call.1} parent=5 // pred_check_branch
        %186 = sbr.rel (%p184) target = $region24
      $region23: #{tpu_custom_call.1} parent=5 // pred_region
        // Predicated region
        $region25: #{tpu_custom_call.1} parent=23 // pred_check
          %p187 = pneg %p50
        $region26: #{tpu_custom_call.1} parent=23 // pred_check_branch
          %189 = sbr.rel (%p187) target = $region28
        $region27: #{tpu_custom_call.1} parent=23 // pred_region
          %s190 = sand.u32 %s40, 1
          %s191 = scalar_lea.sflag [#allocation4], %s190
          %s192 = sand.u32 %s40, 1
          %s193 = smul.addr %s192, 128
          %s194 = scalar_lea.vmem [#allocation3], %s193
          %s195 = smul.u32 8, %s24
          %197 = vsyncadd %s191, 0
          %s198 = smul.addr %s195, 2
          %s199 = smul.addr %s23, 16
          %s200 = sadd.s32 %s198, %s199
          %s201 = smul.addr %s200, 8
          %s202 = scalar_lea.hbm %s0, %s201
          %s203 = sshll.u32 %s202, 4
          %s204 = int_to_ptr.hbm [resolvable:$true] %s203
          %s205 = sshll.u32 %s194, 4
          %s206 = int_to_ptr.vmem [resolvable:$true] %s205
          %211 = dma.hbm_to_vmem [thread:$0]  %s204, 2048, %s206, %s191, 128, 128, 8
        $region28: #{tpu_custom_call.1} parent=23 // pred_fallthru
          _
        // Predicated region
        $region29: #{tpu_custom_call.1} parent=23 // pred_check
          %p212 = pneg %p86
        $region30: #{tpu_custom_call.1} parent=23 // pred_check_branch
          %214 = sbr.rel (%p212) target = $region32
        $region31: #{tpu_custom_call.1} parent=23 // pred_region
          %s215 = sand.u32 %s76, 1
          %s216 = scalar_lea.sflag [#allocation6], %s215
          %s217 = sand.u32 %s76, 1
          %s218 = smul.addr %s217, 16
          %s219 = scalar_lea.vmem [#allocation5], %s218
          %s220 = sadd.s32 %s24, 1
          %s221 = smul.u32 %s220, 8
          %p222 = scmp.lt.s32.totalorder %s221, 7
          %s223 = scalar_select %p222, %s221, 7
          %225 = vsyncadd %s216, 0
          %s226 = smul.addr %s223, 2
          %s227 = smul.addr %s23, 16
          %s228 = sadd.s32 %s226, %s227
          %s229 = smul.addr %s228, 8
          %s230 = scalar_lea.hbm %s1, %s229
          %s231 = sshll.u32 %s230, 4
          %s232 = int_to_ptr.hbm [resolvable:$true] %s231
          %s233 = sshll.u32 %s219, 4
          %s234 = int_to_ptr.vmem [resolvable:$true] %s233
          %239 = dma.hbm_to_vmem [thread:$0]  %s232, 256, %s234, %s216, 128, 128, 8
        $region32: #{tpu_custom_call.1} parent=23 // pred_fallthru
          _
      $region24: #{tpu_custom_call.1} parent=5 // pred_fallthru
        _
      %p240 = scmp.le.s32.totalorder 1, %s16
      %p241 = scmp.lt.s32.totalorder %s16, 3
      %p242 = pnand %p240, %p241
      %p243 = pneg %p242
      // Predicated region
      $region33: #{tpu_custom_call.1} parent=5 // pred_check
        _
      $region34: #{tpu_custom_call.1} parent=5 // pred_check_branch
        %245 = sbr.rel (%p242) target = $region36
      $region35: #{tpu_custom_call.1} parent=5 // pred_region
        %s246 = ssub.s32 %s16, 1
        %s247 = sand.u32 %s43, 1
        %s248 = scalar_lea.sflag [#allocation4], %s247
        %s249 = sand.u32 %s43, 1
        %s250 = smul.addr %s249, 128
        %s251 = scalar_lea.vmem [#allocation3], %s250
        // Predicated region
        $region37: #{tpu_custom_call.1} parent=35 // pred_check
          %p252 = pneg %p56
        $region38: #{tpu_custom_call.1} parent=35 // pred_check_branch
          %254 = sbr.rel (%p252) target = $region40
        $region39: #{tpu_custom_call.1} parent=35 // pred_region
          %256 = dma.done %s248, 2048
        $region40: #{tpu_custom_call.1} parent=35 // pred_fallthru
          _
        %s257 = sand.u32 %s79, 1
        %s258 = scalar_lea.sflag [#allocation6], %s257
        %s259 = sand.u32 %s79, 1
        %s260 = smul.addr %s259, 16
        %s261 = scalar_lea.vmem [#allocation5], %s260
        // Predicated region
        $region41: #{tpu_custom_call.1} parent=35 // pred_check
          %p262 = pneg %p92
        $region42: #{tpu_custom_call.1} parent=35 // pred_check_branch
          %264 = sbr.rel (%p262) target = $region44
        $region43: #{tpu_custom_call.1} parent=35 // pred_region
          %266 = dma.done %s258, 256
        $region44: #{tpu_custom_call.1} parent=35 // pred_fallthru
          _
        %s267 = sand.u32 %s43, 1
        %s268 = scalar_lea.sflag [#allocation4], %s267
        %s269 = sand.u32 %s43, 1
        %s270 = smul.addr %s269, 128
        %s271 = scalar_lea.vmem [#allocation3], %s270
        %p272 = pneg %p56
        %p273 = pneg %p53
        %s274 = sand.u32 %s79, 1
        %s275 = scalar_lea.sflag [#allocation6], %s274
        %s276 = sand.u32 %s79, 1
        %s277 = smul.addr %s276, 16
        %s278 = scalar_lea.vmem [#allocation5], %s277
        %p279 = pneg %p92
        %p280 = pneg %p89
        %p281 = pneg %p113
        %p282 = pneg %p110
        %p283 = pneg %p134
        %p284 = pneg %p131
        %p285 = pneg %p162
        %p286 = pneg %p159
        %s287 = smul.u32 8, %s26
        %p288 = scmp.lt.s32.totalorder %s25, 1
        %s289 = scalar_select %p288, %s25, 1
        %p290 = scmp.lt.s32.totalorder %s287, 7
        %s291 = scalar_select %p290, %s287, 7
        %s292 = smul.addr %s289, 8
        %s293 = sadd.s32 %s291, %s292
        %s294 = smul.addr %s293, 8
        %s295 = scalar_lea.vmem %s4, %s294
        %s296 = smul.u32 8, %s26
        %s297 = sadd.s32 %s26, 1
        %s298 = smul.u32 %s297, 8
        %p299 = scmp.lt.s32.totalorder %s298, 7
        %s300 = scalar_select %p299, %s298, 7
        %s301 = smul.u32 8, %s26
        %p302 = scmp.lt.s32.totalorder %s25, 1
        %s303 = scalar_select %p302, %s25, 1
        %p304 = scmp.lt.s32.totalorder %s301, 7
        %s305 = scalar_select %p304, %s301, 7
        %s306 = smul.addr %s303, 8
        %s307 = sadd.s32 %s305, %s306
        %s308 = smul.addr %s307, 8
        %s309 = scalar_lea.vmem %s4, %s308
        %s310 = smul.u32 8, %s26
        %p311 = scmp.eq.s32.totalorder %s26, 0
        %v312 = vld [vmem:[%s261] sm:$0xff]
        %s313 = scalar_select %p311, 1, 0
        %v314 = vstv %s313
        %vm315 = vcmp.eq.s32.totalorder %v314, 1
        %v316 = vsel %vm315, 0.0, %v312
        %s317 = scalar_lea.vmem %s251, 16 [#allocation3]
        %v318 = vld [vmem:[%s317] sm:$0xff]
        %v319 = vld [vmem:[%s317 + $0x10] sm:$0xff]
        %v320 = vld [vmem:[%s317 + $0x20] sm:$0xff]
        %v321 = vld [vmem:[%s317 + $0x30] sm:$0xff]
        %v322 = vld [vmem:[%s317 + $0x40] sm:$0xff]
        %v323 = vld [vmem:[%s317 + $0x50] sm:$0xff]
        %v324 = vld [vmem:[%s317 + $0x60] sm:$0xff]
        %vm325 = vcmask 64512
        %326 = vst.msk [vmem:[#allocation2] sm:$0xff] %vm325, %v318
        %327 = vst.msk [vmem:[#allocation2 + $0x8] sm:$0xff] %vm325, %v319
        %328 = vst.msk [vmem:[#allocation2 + $0x10] sm:$0xff] %vm325, %v320
        %329 = vst.msk [vmem:[#allocation2 + $0x18] sm:$0xff] %vm325, %v321
        %330 = vst.msk [vmem:[#allocation2 + $0x20] sm:$0xff] %vm325, %v322
        %331 = vst.msk [vmem:[#allocation2 + $0x28] sm:$0xff] %vm325, %v323
        %332 = vst.msk [vmem:[#allocation2 + $0x30] sm:$0xff] %vm325, %v324
        %s333 = scalar_lea.vmem [#allocation2], 56
        %334 = vst.msk [vmem:[%s333] sm:$0xff] %vm325, %v316
        %vm335 = vcmask 155712
        %336 = vst.msk [vmem:[#allocation2 + $0x7] sm:$0x1] %vm335, 0.0
        %337 = vst.msk [vmem:[#allocation2 + $0xf] sm:$0x1] %vm335, 0.0
        %338 = vst.msk [vmem:[#allocation2 + $0x17] sm:$0x1] %vm335, 0.0
        %339 = vst.msk [vmem:[#allocation2 + $0x1f] sm:$0x1] %vm335, 0.0
        %340 = vst.msk [vmem:[#allocation2 + $0x27] sm:$0x1] %vm335, 0.0
        %341 = vst.msk [vmem:[#allocation2 + $0x2f] sm:$0x1] %vm335, 0.0
        %342 = vst.msk [vmem:[#allocation2 + $0x37] sm:$0x1] %vm335, 0.0
        %343 = vst.msk [vmem:[#allocation2 + $0x3f] sm:$0x1] %vm335, 0.0
        %v344 = vld [vmem:[%s251 + $0x1] sm:$0x7f]
        %v345 = vld [vmem:[%s251 + $0x11] sm:$0x7f]
        %v346 = vld [vmem:[%s251 + $0x21] sm:$0x7f]
        %v347 = vld [vmem:[%s251 + $0x31] sm:$0x7f]
        %v348 = vld [vmem:[%s251 + $0x41] sm:$0x7f]
        %v349 = vld [vmem:[%s251 + $0x51] sm:$0x7f]
        %v350 = vld [vmem:[%s251 + $0x61] sm:$0x7f]
        %v351 = vld [vmem:[%s251 + $0x71] sm:$0x7f]
        %360 = vrot.lane.b32.xlu0 %v344, 8
        %v361 = vpop.permute.xlu0 %360
        %362 = vrot.lane.b32.xlu0 %v345, 8
        %v363 = vpop.permute.xlu0 %362
        %364 = vrot.lane.b32.xlu0 %v346, 8
        %v365 = vpop.permute.xlu0 %364
        %366 = vrot.lane.b32.xlu0 %v347, 8
        %v367 = vpop.permute.xlu0 %366
        %368 = vrot.lane.b32.xlu0 %v348, 8
        %v369 = vpop.permute.xlu0 %368
        %370 = vrot.lane.b32.xlu0 %v349, 8
        %v371 = vpop.permute.xlu0 %370
        %372 = vrot.lane.b32.xlu0 %v350, 8
        %v373 = vpop.permute.xlu0 %372
        %374 = vrot.lane.b32.xlu0 %v351, 8
        %v375 = vpop.permute.xlu0 %374
        %vm384 = vcmask 96320
        %385 = vst.msk [vmem:[#allocation2] sm:$0x7f] %vm384, %v361
        %386 = vst.msk [vmem:[#allocation2 + $0x8] sm:$0x7f] %vm384, %v363
        %387 = vst.msk [vmem:[#allocation2 + $0x10] sm:$0x7f] %vm384, %v365
        %388 = vst.msk [vmem:[#allocation2 + $0x18] sm:$0x7f] %vm384, %v367
        %389 = vst.msk [vmem:[#allocation2 + $0x20] sm:$0x7f] %vm384, %v369
        %390 = vst.msk [vmem:[#allocation2 + $0x28] sm:$0x7f] %vm384, %v371
        %391 = vst.msk [vmem:[#allocation2 + $0x30] sm:$0x7f] %vm384, %v373
        %392 = vst.msk [vmem:[#allocation2 + $0x38] sm:$0x7f] %vm384, %v375
        %s393 = scalar_lea.vmem %s251, 8 [#allocation3]
        %v394 = vld [vmem:[%s393 + $0x1] sm:$0x7f]
        %v395 = vld [vmem:[%s393 + $0x11] sm:$0x7f]
        %v396 = vld [vmem:[%s393 + $0x21] sm:$0x7f]
        %v397 = vld [vmem:[%s393 + $0x31] sm:$0x7f]
        %v398 = vld [vmem:[%s393 + $0x41] sm:$0x7f]
        %v399 = vld [vmem:[%s393 + $0x51] sm:$0x7f]
        %v400 = vld [vmem:[%s393 + $0x61] sm:$0x7f]
        %v401 = vld [vmem:[%s393 + $0x71] sm:$0x7f]
        %410 = vrot.lane.b32.xlu0 %v394, 12
        %v411 = vpop.permute.xlu0 %410
        %412 = vrot.lane.b32.xlu0 %v395, 12
        %v413 = vpop.permute.xlu0 %412
        %414 = vrot.lane.b32.xlu0 %v396, 12
        %v415 = vpop.permute.xlu0 %414
        %416 = vrot.lane.b32.xlu0 %v397, 12
        %v417 = vpop.permute.xlu0 %416
        %418 = vrot.lane.b32.xlu0 %v398, 12
        %v419 = vpop.permute.xlu0 %418
        %420 = vrot.lane.b32.xlu0 %v399, 12
        %v421 = vpop.permute.xlu0 %420
        %422 = vrot.lane.b32.xlu0 %v400, 12
        %v423 = vpop.permute.xlu0 %422
        %424 = vrot.lane.b32.xlu0 %v401, 12
        %v425 = vpop.permute.xlu0 %424
        %vm434 = vcmask 129120
        %435 = vst.msk [vmem:[#allocation2] sm:$0x7f] %vm434, %v411
        %436 = vst.msk [vmem:[#allocation2 + $0x8] sm:$0x7f] %vm434, %v413
        %437 = vst.msk [vmem:[#allocation2 + $0x10] sm:$0x7f] %vm434, %v415
        %438 = vst.msk [vmem:[#allocation2 + $0x18] sm:$0x7f] %vm434, %v417
        %439 = vst.msk [vmem:[#allocation2 + $0x20] sm:$0x7f] %vm434, %v419
        %440 = vst.msk [vmem:[#allocation2 + $0x28] sm:$0x7f] %vm434, %v421
        %441 = vst.msk [vmem:[#allocation2 + $0x30] sm:$0x7f] %vm434, %v423
        %442 = vst.msk [vmem:[#allocation2 + $0x38] sm:$0x7f] %vm434, %v425
        %v443 = vld [vmem:[%s317 + $0x1] sm:$0x7f]
        %v444 = vld [vmem:[%s317 + $0x11] sm:$0x7f]
        %v445 = vld [vmem:[%s317 + $0x21] sm:$0x7f]
        %v446 = vld [vmem:[%s317 + $0x31] sm:$0x7f]
        %v447 = vld [vmem:[%s317 + $0x41] sm:$0x7f]
        %v448 = vld [vmem:[%s317 + $0x51] sm:$0x7f]
        %v449 = vld [vmem:[%s317 + $0x61] sm:$0x7f]
        %457 = vrot.lane.b32.xlu0 %v443, 16
        %v458 = vpop.permute.xlu0 %457
        %459 = vrot.lane.b32.xlu0 %v444, 16
        %v460 = vpop.permute.xlu0 %459
        %461 = vrot.lane.b32.xlu0 %v445, 16
        %v462 = vpop.permute.xlu0 %461
        %463 = vrot.lane.b32.xlu0 %v446, 16
        %v464 = vpop.permute.xlu0 %463
        %465 = vrot.lane.b32.xlu0 %v447, 16
        %v466 = vpop.permute.xlu0 %465
        %467 = vrot.lane.b32.xlu0 %v448, 16
        %v468 = vpop.permute.xlu0 %467
        %469 = vrot.lane.b32.xlu0 %v449, 16
        %v470 = vpop.permute.xlu0 %469
        %vm478 = vcmask 161920
        %479 = vst.msk [vmem:[#allocation2] sm:$0x7f] %vm478, %v458
        %480 = vst.msk [vmem:[#allocation2 + $0x8] sm:$0x7f] %vm478, %v460
        %481 = vst.msk [vmem:[#allocation2 + $0x10] sm:$0x7f] %vm478, %v462
        %482 = vst.msk [vmem:[#allocation2 + $0x18] sm:$0x7f] %vm478, %v464
        %483 = vst.msk [vmem:[#allocation2 + $0x20] sm:$0x7f] %vm478, %v466
        %484 = vst.msk [vmem:[#allocation2 + $0x28] sm:$0x7f] %vm478, %v468
        %485 = vst.msk [vmem:[#allocation2 + $0x30] sm:$0x7f] %vm478, %v470
        %487 = vrot.lane.b32.xlu0 %v316, 16
        %v488 = vpop.permute.xlu0 %487
        %vm490 = vcmask 162945
        %491 = vst.msk [vmem:[%s333 - $0x1] sm:$0xfe] %vm490, %v488
        %v492 = vld [vmem:[%s251] sm:$0xff]
        %v493 = vld [vmem:[%s251 + $0x10] sm:$0xff]
        %v494 = vld [vmem:[%s251 + $0x20] sm:$0xff]
        %v495 = vld [vmem:[%s251 + $0x30] sm:$0xff]
        %v496 = vld [vmem:[%s251 + $0x40] sm:$0xff]
        %v497 = vld [vmem:[%s251 + $0x50] sm:$0xff]
        %v498 = vld [vmem:[%s251 + $0x60] sm:$0xff]
        %v499 = vld [vmem:[%s251 + $0x70] sm:$0xff]
        %v500 = vld [vmem:[%s2] sm:$0xff]
        %v501 = vld [vmem:[%s393] sm:$0xff]
        %v502 = vld [vmem:[%s393 + $0x10] sm:$0xff]
        %v503 = vld [vmem:[%s393 + $0x20] sm:$0xff]
        %v504 = vld [vmem:[%s393 + $0x30] sm:$0xff]
        %v505 = vld [vmem:[%s393 + $0x40] sm:$0xff]
        %v506 = vld [vmem:[%s393 + $0x50] sm:$0xff]
        %v507 = vld [vmem:[%s393 + $0x60] sm:$0xff]
        %v508 = vld [vmem:[%s393 + $0x70] sm:$0xff]
        %v509 = vld [vmem:[%s2 + $0x8] sm:$0xff]
        %v511 = vsel %vm325, %v501, 0
        %v514 = vsel %vm325, %v502, 0
        %v517 = vsel %vm325, %v503, 0
        %v520 = vsel %vm325, %v504, 0
        %v523 = vsel %vm325, %v505, 0
        %v526 = vsel %vm325, %v506, 0
        %v529 = vsel %vm325, %v507, 0
        %v532 = vsel %vm325, %v508, 0
        %534 = vmatpush.msra.mxu0 0.0
        %535 = vmatpush.msra.mxu0 0.0
        %536 = vmatpush.msra.mxu0 0.0
        %537 = vmatpush.msra.mxu0 0.0
        %538 = vmatpush.msra.mxu0 0.0
        %539 = vmatpush.msra.mxu0 0.0
        %540 = vmatpush.msra.mxu0 0.0
        %541 = vmatpush.msra.mxu0 0.0
        %542 = vmatpush.msra.mxu0 0.0
        %543 = vmatpush.msra.mxu0 0.0
        %544 = vmatpush.msra.mxu0 0.0
        %545 = vmatpush.msra.mxu0 0.0
        %546 = vmatpush.msra.mxu0 0.0
        %547 = vmatpush.msra.mxu0 0.0
        %548 = vmatpush.msra.mxu0 0.0
        %549 = vmatpush.msra.mxu0 %v509
        %550 = vmatmul.f32.gmra.mxu0 %v511
        %v551 = vpop.f32.mrf.mxu0
        %v552 = vadd.f32 0.0, %v551
        %553 = vmatmul.f32.gmra.mxu0 %v514
        %v554 = vpop.f32.mrf.mxu0
        %v555 = vadd.f32 0.0, %v554
        %556 = vmatmul.f32.gmra.mxu0 %v517
        %v557 = vpop.f32.mrf.mxu0
        %v558 = vadd.f32 0.0, %v557
        %559 = vmatmul.f32.gmra.mxu0 %v520
        %v560 = vpop.f32.mrf.mxu0
        %v561 = vadd.f32 0.0, %v560
        %562 = vmatmul.f32.gmra.mxu0 %v523
        %v563 = vpop.f32.mrf.mxu0
        %v564 = vadd.f32 0.0, %v563
        %565 = vmatmul.f32.gmra.mxu0 %v526
        %v566 = vpop.f32.mrf.mxu0
        %v567 = vadd.f32 0.0, %v566
        %568 = vmatmul.f32.gmra.mxu0 %v529
        %v569 = vpop.f32.mrf.mxu0
        %v570 = vadd.f32 0.0, %v569
        %571 = vmatmul.f32.gmra.mxu0 %v532
        %v572 = vpop.f32.mrf.mxu0
        %v573 = vadd.f32 0.0, %v572
        %574 = vdwg.mxu0
        %v576 = vsel %vm325, %v492, 0
        %v579 = vsel %vm325, %v493, 0
        %v582 = vsel %vm325, %v494, 0
        %v585 = vsel %vm325, %v495, 0
        %v588 = vsel %vm325, %v496, 0
        %v591 = vsel %vm325, %v497, 0
        %v594 = vsel %vm325, %v498, 0
        %v597 = vsel %vm325, %v499, 0
        %599 = vmatpush.msra.mxu0 0.0
        %600 = vmatpush.msra.mxu0 0.0
        %601 = vmatpush.msra.mxu0 0.0
        %602 = vmatpush.msra.mxu0 0.0
        %603 = vmatpush.msra.mxu0 0.0
        %604 = vmatpush.msra.mxu0 0.0
        %605 = vmatpush.msra.mxu0 0.0
        %606 = vmatpush.msra.mxu0 0.0
        %607 = vmatpush.msra.mxu0 0.0
        %608 = vmatpush.msra.mxu0 0.0
        %609 = vmatpush.msra.mxu0 0.0
        %610 = vmatpush.msra.mxu0 0.0
        %611 = vmatpush.msra.mxu0 0.0
        %612 = vmatpush.msra.mxu0 0.0
        %613 = vmatpush.msra.mxu0 0.0
        %614 = vmatpush.msra.mxu0 %v500
        %615 = vmatmul.f32.gmra.mxu0 %v576
        %v616 = vpop.f32.mrf.mxu0
        %v617 = vadd.f32 %v552, %v616
        %618 = vmatmul.f32.gmra.mxu0 %v579
        %v619 = vpop.f32.mrf.mxu0
        %v620 = vadd.f32 %v555, %v619
        %621 = vmatmul.f32.gmra.mxu0 %v582
        %v622 = vpop.f32.mrf.mxu0
        %v623 = vadd.f32 %v558, %v622
        %624 = vmatmul.f32.gmra.mxu0 %v585
        %v625 = vpop.f32.mrf.mxu0
        %v626 = vadd.f32 %v561, %v625
        %627 = vmatmul.f32.gmra.mxu0 %v588
        %v628 = vpop.f32.mrf.mxu0
        %v629 = vadd.f32 %v564, %v628
        %630 = vmatmul.f32.gmra.mxu0 %v591
        %v631 = vpop.f32.mrf.mxu0
        %v632 = vadd.f32 %v567, %v631
        %633 = vmatmul.f32.gmra.mxu0 %v594
        %v634 = vpop.f32.mrf.mxu0
        %v635 = vadd.f32 %v570, %v634
        %636 = vmatmul.f32.gmra.mxu0 %v597
        %v637 = vpop.f32.mrf.mxu0
        %v638 = vadd.f32 %v573, %v637
        %639 = vdwg.mxu0
        %v640 = vld [vmem:[#allocation2] sm:$0xff]
        %v641 = vld [vmem:[#allocation2 + $0x8] sm:$0xff]
        %v642 = vld [vmem:[#allocation2 + $0x10] sm:$0xff]
        %v643 = vld [vmem:[#allocation2 + $0x18] sm:$0xff]
        %v644 = vld [vmem:[#allocation2 + $0x20] sm:$0xff]
        %v645 = vld [vmem:[#allocation2 + $0x28] sm:$0xff]
        %v646 = vld [vmem:[#allocation2 + $0x30] sm:$0xff]
        %v647 = vld [vmem:[#allocation2 + $0x38] sm:$0xff]
        %v648 = vld [vmem:[%s2 + $0x10] sm:$0xff]
        %v649 = vld [vmem:[%s2 + $0x18] sm:$0xff]
        %v650 = vld [vmem:[%s2 + $0x20] sm:$0xf]
        %vm651 = vcmask 162816
        %v653 = vsel %vm651, %v640, 0
        %v656 = vsel %vm651, %v641, 0
        %v659 = vsel %vm651, %v642, 0
        %v662 = vsel %vm651, %v643, 0
        %v665 = vsel %vm651, %v644, 0
        %v668 = vsel %vm651, %v645, 0
        %v671 = vsel %vm651, %v646, 0
        %v674 = vsel %vm651, %v647, 0
        %vm676 = vcmask 1043456
        %v678 = vsel %vm676, %v650, 0
        %680 = vmatpush.msra.mxu0 0.0
        %681 = vmatpush.msra.mxu0 0.0
        %682 = vmatpush.msra.mxu0 0.0
        %683 = vmatpush.msra.mxu0 0.0
        %684 = vmatpush.msra.mxu0 0.0
        %685 = vmatpush.msra.mxu0 0.0
        %686 = vmatpush.msra.mxu0 0.0
        %687 = vmatpush.msra.mxu0 0.0
        %688 = vmatpush.msra.mxu0 0.0
        %689 = vmatpush.msra.mxu0 0.0
        %690 = vmatpush.msra.mxu0 0.0
        %691 = vmatpush.msra.mxu0 0.0
        %692 = vmatpush.msra.mxu0 0.0
        %693 = vmatpush.msra.mxu0 %v678
        %694 = vmatpush.msra.mxu0 %v649
        %695 = vmatpush.msra.mxu0 %v648
        %696 = vmatmul.f32.gmra.mxu0 %v653
        %v697 = vpop.f32.mrf.mxu0
        %v698 = vadd.f32 0.0, %v697
        %699 = vmatmul.f32.gmra.mxu0 %v656
        %v700 = vpop.f32.mrf.mxu0
        %v701 = vadd.f32 0.0, %v700
        %702 = vmatmul.f32.gmra.mxu0 %v659
        %v703 = vpop.f32.mrf.mxu0
        %v704 = vadd.f32 0.0, %v703
        %705 = vmatmul.f32.gmra.mxu0 %v662
        %v706 = vpop.f32.mrf.mxu0
        %v707 = vadd.f32 0.0, %v706
        %708 = vmatmul.f32.gmra.mxu0 %v665
        %v709 = vpop.f32.mrf.mxu0
        %v710 = vadd.f32 0.0, %v709
        %711 = vmatmul.f32.gmra.mxu0 %v668
        %v712 = vpop.f32.mrf.mxu0
        %v713 = vadd.f32 0.0, %v712
        %714 = vmatmul.f32.gmra.mxu0 %v671
        %v715 = vpop.f32.mrf.mxu0
        %v716 = vadd.f32 0.0, %v715
        %717 = vmatmul.f32.gmra.mxu0 %v674
        %v718 = vpop.f32.mrf.mxu0
        %v719 = vadd.f32 0.0, %v718
        %720 = vdwg.mxu0
        %v721 = vadd.f32 %v617, %v698
        %v722 = vadd.f32 %v620, %v701
        %v723 = vadd.f32 %v623, %v704
        %v724 = vadd.f32 %v626, %v707
        %v725 = vadd.f32 %v629, %v710
        %v726 = vadd.f32 %v632, %v713
        %v727 = vadd.f32 %v635, %v716
        %v728 = vadd.f32 %v638, %v719
        %v729 = vld [vmem:[%s3] sm:$0x1]
        %v731 = vperm.slane %v729, 0
        %v733 = vadd.f32 %v721, %v731
        %v734 = vadd.f32 %v722, %v731
        %v735 = vadd.f32 %v723, %v731
        %v736 = vadd.f32 %v724, %v731
        %v737 = vadd.f32 %v725, %v731
        %v738 = vadd.f32 %v726, %v731
        %v739 = vadd.f32 %v727, %v731
        %v740 = vadd.f32 %v728, %v731
        %vm741 = vcmask 31744
        %742 = vst.msk [vmem:[%s309] sm:$0xff] %vm741, %v733
        %743 = vst.msk [vmem:[%s309 + $0x8] sm:$0xff] %vm741, %v734
        %744 = vst.msk [vmem:[%s309 + $0x10] sm:$0xff] %vm741, %v735
        %745 = vst.msk [vmem:[%s309 + $0x18] sm:$0xff] %vm741, %v736
        %746 = vst.msk [vmem:[%s309 + $0x20] sm:$0xff] %vm741, %v737
        %747 = vst.msk [vmem:[%s309 + $0x28] sm:$0xff] %vm741, %v738
        %748 = vst.msk [vmem:[%s309 + $0x30] sm:$0xff] %vm741, %v739
        %749 = vst.msk [vmem:[%s309 + $0x38] sm:$0xff] %vm741, %v740
        %s750 = smul.u32 8, %s26
        %p751 = scmp.lt.s32.totalorder %s25, 1
        %s752 = scalar_select %p751, %s25, 1
        %p753 = scmp.lt.s32.totalorder %s750, 7
        %s754 = scalar_select %p753, %s750, 7
        %s755 = smul.addr %s752, 8
        %s756 = sadd.s32 %s754, %s755
        %s757 = smul.addr %s756, 8
        %s758 = scalar_lea.vmem %s4, %s757
        // Predicated region
        $region45: #{tpu_custom_call.1} parent=35 // pred_check
          %p759 = pneg %p159
        $region46: #{tpu_custom_call.1} parent=35 // pred_check_branch
          %761 = sbr.rel (%p759) target = $region48
        $region47: #{tpu_custom_call.1} parent=35 // pred_region
          %s762 = smul.u32 8, %s26
        $region48: #{tpu_custom_call.1} parent=35 // pred_fallthru
          _
      $region36: #{tpu_custom_call.1} parent=5 // pred_fallthru
        _
      %p763 = scmp.le.s32.totalorder 2, %s16
      // Predicated region
      $region49: #{tpu_custom_call.1} parent=5 // pred_check
        %p764 = pneg %p763
      $region50: #{tpu_custom_call.1} parent=5 // pred_check_branch
        %766 = sbr.rel (%p764) target = $region52
      $region51: #{tpu_custom_call.1} parent=5 // pred_region
        %s767 = ssub.s32 %s16, 2
        // Predicated region
        $region53: #{tpu_custom_call.1} parent=51 // pred_check
          %p768 = pneg %p165
        $region54: #{tpu_custom_call.1} parent=51 // pred_check_branch
          %770 = sbr.rel (%p768) target = $region56
        $region55: #{tpu_custom_call.1} parent=51 // pred_region
          %s771 = smul.u32 8, %s28
          %p772 = scmp.lt.s32.totalorder %s27, 1
          %s773 = scalar_select %p772, %s27, 1
          %p774 = scmp.lt.s32.totalorder %s771, 7
          %s775 = scalar_select %p774, %s771, 7
          %s776 = smul.addr %s773, 8
          %s777 = sadd.s32 %s775, %s776
          %s778 = smul.addr %s777, 8
          %s779 = scalar_lea.vmem %s4, %s778
        $region56: #{tpu_custom_call.1} parent=51 // pred_fallthru
          _
      $region52: #{tpu_custom_call.1} parent=5 // pred_fallthru
        _
    $region6: #{tpu_custom_call.1} parent=1 // loop_footer
      %s20 = sadd.s32 1, %s16
    $region7: #{tpu_custom_call.1} parent=1 // loop_footer_branch
      %15 = sbr.rel target = $region3
    $region8: #{tpu_custom_call.1} parent=1 // loop_exit
      _
    %780 = vsyncpa [#allocation4], 1
    %s781 = scalar_lea.sflag [#allocation4], 1
    %782 = vsyncpa %s781, 1
    %783 = vsyncpa [#allocation6], 1
    %s784 = scalar_lea.sflag [#allocation6], 1
    %785 = vsyncpa %s784, 1

</llo_original>
